<compile_context>
chip_gen: v7x
topology: tpu7x:2x2x1
jax: 0.10.0
libtpu: 0.0.40
codegen_flags: <defaults>
</compile_context>

<pallas_src>
import math

import jax
import jax.numpy as jnp
from jax.experimental import pallas as pl
from jax.experimental.pallas import tpu as pltpu


def _round_up(x, m):
    return ((x + m - 1) // m) * m


def _embedding_kernel(t_ref, w_ref, b_ref, e_ref, o_ref):
    # t_ref: (TM, 1), w_ref: (1, Hp), b_ref: (1, Hp), e_ref: (Hp, Op),
    # o_ref: (TM, Op)
    t = t_ref[...]                              # (TM, 1)
    w = w_ref[...]                              # (1, Hp)
    b = b_ref[...]                              # (1, Hp)

    # projection = t * weights + biases  (broadcast as in torch) -> (TM, Hp)
    proj = t * w + b

    # Numerically stable softmax numerator; padded lanes (bias = -1e30)
    # underflow to exactly 0 and the padded E rows are zero.
    m = jnp.max(proj, axis=-1, keepdims=True)   # (TM, 1)
    p = jnp.exp(proj - m)                       # (TM, Hp)
    denom = jnp.sum(p, axis=-1, keepdims=True)  # (TM, 1)

    # Unnormalized matmul on the MXU, then scale by 1/denom in the epilogue
    # (EUP reciprocal + O multiplies per row instead of H divides per row).
    out = jnp.dot(p, e_ref[...], preferred_element_type=jnp.float32)
    o_ref[...] = out * pl.reciprocal(denom, approx=True)


def embedding_forward(t, weights, biases, embedding_matrix, *, tm_max=1024):
    """t: (B, S) float; returns (B, S, O) float32."""
    B, S = t.shape
    H = weights.shape[1]
    O = embedding_matrix.shape[1]
    M = B * S

    # ---- lane-dense padding of the hidden / output axes (multiples of 128)
    Hp = _round_up(H, 128)
    Op = _round_up(O, 128)

    w_p = jnp.zeros((1, Hp), jnp.float32).at[:, :H].set(
        weights.astype(jnp.float32))
    # padded hidden lanes get a huge negative bias -> exp() == 0 exactly,
    # so the softmax over the real H lanes is unchanged.
    b_p = jnp.full((1, Hp), -1e30, jnp.float32).at[:, :H].set(
        biases.reshape(1, H).astype(jnp.float32))
    e_p = jnp.zeros((Hp, Op), jnp.float32).at[:H, :O].set(
        embedding_matrix.astype(jnp.float32))

    # ---- tile the M = B*S axis; pad M so every tile is full and 8-aligned
    M8 = _round_up(M, 8)
    TM = min(tm_max, M8)
    Mp = _round_up(M8, TM)
    t_flat = jnp.zeros((Mp, 1), jnp.float32).at[:M, 0].set(
        t.reshape(M).astype(jnp.float32))

    grid = (Mp // TM,)

    cost = pl.CostEstimate(
        flops=2 * Mp * Hp * Op + 5 * Mp * Hp,
        transcendentals=Mp * Hp + Mp,
        bytes_accessed=4 * (Mp + Mp * Op + Hp * Op + 2 * Hp),
    )

    out_flat = pl.pallas_call(
        _embedding_kernel,
        out_shape=jax.ShapeDtypeStruct((Mp, Op), jnp.float32),
        grid_spec=pltpu.PrefetchScalarGridSpec(
            num_scalar_prefetch=0,
            grid=grid,
            in_specs=[
                # per-tile rows of t
                pl.BlockSpec((TM, 1), lambda i: (i, 0)),
                # parameters stay VMEM-resident (constant block index)
                pl.BlockSpec((1, Hp), lambda i: (0, 0)),
                pl.BlockSpec((1, Hp), lambda i: (0, 0)),
                pl.BlockSpec((Hp, Op), lambda i: (0, 0)),
            ],
            out_specs=pl.BlockSpec((TM, Op), lambda i: (i, 0)),
        ),
        compiler_params=pltpu.CompilerParams(
            dimension_semantics=("parallel",),
            vmem_limit_bytes=32 * 1024 * 1024,
        ),
        cost_estimate=cost,
    )(t_flat, w_p, b_p, e_p)

    return out_flat[:M, :O].reshape(B, S, O)


def init_params(key, hidden_embedding_size, output_dim):
    """Deterministic parameter init mirroring the module's init_weights()."""
    k1, k2 = jax.random.split(key)
    H, O = hidden_embedding_size, output_dim

    # xavier_uniform_ for weights (1, H): bound = sqrt(6 / (fan_in + fan_out))
    bound_w = math.sqrt(6.0 / (1 + H))
    weights = jax.random.uniform(k1, (1, H), jnp.float32, -bound_w, bound_w)

    # biases zero-initialized
    biases = jnp.zeros((H,), jnp.float32)

    # xavier_uniform_ for embedding_matrix (H, O)
    bound_e = math.sqrt(6.0 / (H + O))
    embedding_matrix = jax.random.uniform(k2, (H, O), jnp.float32,
                                          -bound_e, bound_e)
    return weights, biases, embedding_matrix


def reference_forward(t, weights, biases, embedding_matrix):
    """Pure-JAX reference matching the PyTorch forward exactly (f32)."""
    proj = t[..., None] * weights + biases            # (B, S, H)
    s = jax.nn.softmax(proj, axis=2)
    return jnp.einsum('bsv,vi->bsi', s, embedding_matrix)


if __name__ == "__main__":
    key = jax.random.PRNGKey(0)
    k_param, k_input = jax.random.split(key)

    batch_size = 2
    seq_len = 8
    hidden_embedding_size = 32
    output_dim = 16

    weights, biases, embedding_matrix = init_params(
        k_param, hidden_embedding_size, output_dim)

    t = jax.random.normal(k_input, (batch_size, seq_len), jnp.float32)

    out = embedding_forward(t, weights, biases, embedding_matrix)
    out = jax.block_until_ready(out)

    ref = reference_forward(t, weights, biases, embedding_matrix)
    assert out.shape == (batch_size, seq_len, output_dim), out.shape
    # tolerance accounts for the approximate (EUP) reciprocal in the epilogue
    assert jnp.allclose(out, ref, atol=2e-3, rtol=2e-3), \
        float(jnp.max(jnp.abs(out - ref)))

    print("KERNEL_OK")
</pallas_src>

<mosaic_0001>
module attributes {stable_mosaic.version = 11 : i64} {
  func.func @_embedding_kernel(%arg0: i32, %arg1: memref<16x1xf32, #tpu.memory_space<vmem>>, %arg2: memref<1x128xf32, #tpu.memory_space<vmem>>, %arg3: memref<1x128xf32, #tpu.memory_space<vmem>>, %arg4: memref<128x128xf32, #tpu.memory_space<vmem>>, %arg5: memref<16x128xf32, #tpu.memory_space<vmem>>) attributes {dimension_semantics = [#tpu.dimension_semantics<parallel>], iteration_bounds = array<i64: 1>, scalar_prefetch = 0 : i64, scratch_operands = 0 : i64, tpu.core_type = #tpu.core_type<tc>, window_params = [{transform_indices = @transform_0, window_bounds = array<i64: 16, 1>}, {pipeline_mode = #tpu.pipeline_mode<synchronous>, transform_indices = @transform_1, window_bounds = array<i64: 1, 128>}, {pipeline_mode = #tpu.pipeline_mode<synchronous>, transform_indices = @transform_2, window_bounds = array<i64: 1, 128>}, {pipeline_mode = #tpu.pipeline_mode<synchronous>, transform_indices = @transform_3, window_bounds = array<i64: 128, 128>}, {transform_indices = @transform_4, window_bounds = array<i64: 16, 128>}]} {
    %c0 = arith.constant 0 : index
    %c0_0 = arith.constant 0 : index
    %0 = vector.load %arg1[%c0, %c0_0] : memref<16x1xf32, #tpu.memory_space<vmem>>, vector<16x1xf32>
    %c0_1 = arith.constant 0 : index
    %c0_2 = arith.constant 0 : index
    %1 = vector.load %arg2[%c0_1, %c0_2] : memref<1x128xf32, #tpu.memory_space<vmem>>, vector<1x128xf32>
    %c0_3 = arith.constant 0 : index
    %c0_4 = arith.constant 0 : index
    %2 = vector.load %arg3[%c0_3, %c0_4] : memref<1x128xf32, #tpu.memory_space<vmem>>, vector<1x128xf32>
    %3 = vector.broadcast %0 : vector<16x1xf32> to vector<16x128xf32>
    %4 = vector.broadcast %1 : vector<1x128xf32> to vector<16x128xf32>
    %5 = arith.mulf %3, %4 : vector<16x128xf32>
    %6 = vector.broadcast %2 : vector<1x128xf32> to vector<16x128xf32>
    %7 = arith.addf %5, %6 : vector<16x128xf32>
    %cst = arith.constant dense<0xFF800000> : vector<16xf32>
    %8 = vector.multi_reduction <maximumf>, %7, %cst [1] : vector<16x128xf32> to vector<16xf32>
    %9 = vector.shape_cast %8 : vector<16xf32> to vector<16x1xf32>
    %10 = vector.broadcast %9 : vector<16x1xf32> to vector<16x128xf32>
    %11 = arith.subf %7, %10 : vector<16x128xf32>
    %12 = math.exp %11 : vector<16x128xf32>
    %cst_5 = arith.constant dense<0.000000e+00> : vector<16xf32>
    %13 = vector.multi_reduction <add>, %12, %cst_5 [1] : vector<16x128xf32> to vector<16xf32>
    %14 = vector.shape_cast %13 : vector<16xf32> to vector<16x1xf32>
    %c0_6 = arith.constant 0 : index
    %c0_7 = arith.constant 0 : index
    %15 = vector.load %arg4[%c0_6, %c0_7] : memref<128x128xf32, #tpu.memory_space<vmem>>, vector<128x128xf32>
    %cst_8 = arith.constant dense<0.000000e+00> : vector<16x128xf32>
    %16 = tpu.matmul %12, %15, %cst_8 {dimension_numbers = #tpu.dot_dimension_numbers<[1], [0], [0], [1], [0, 0, 1, 1], [], []>} : vector<16x128xf32>, vector<128x128xf32>, vector<16x128xf32> -> vector<16x128xf32>
    %17 = tpu.reciprocal %14 {approx = true} : vector<16x1xf32> -> vector<16x1xf32>
    %18 = vector.broadcast %17 : vector<16x1xf32> to vector<16x128xf32>
    %19 = arith.mulf %16, %18 : vector<16x128xf32>
    %c0_9 = arith.constant 0 : index
    %c0_10 = arith.constant 0 : index
    %20 = vector.load %arg5[%c0_9, %c0_10] : memref<16x128xf32, #tpu.memory_space<vmem>>, vector<16x128xf32>
    tpu.vector_store %arg5[%c0_9, %c0_10], %19 {strides = array<i32>} : memref<16x128xf32, #tpu.memory_space<vmem>>, vector<16x128xf32>,
    return
  }
  func.func @transform_0(%arg0: i32) -> (i32, i32) {
    %c0_i32 = arith.constant 0 : i32
    %c0_i32_0 = arith.constant 0 : i32
    return %arg0, %c0_i32 : i32, i32
  }
  func.func @transform_1(%arg0: i32) -> (i32, i32) {
    %c0_i32 = arith.constant 0 : i32
    %c0_i32_0 = arith.constant 0 : i32
    %c0_i32_1 = arith.constant 0 : i32
    return %c0_i32, %c0_i32_0 : i32, i32
  }
  func.func @transform_2(%arg0: i32) -> (i32, i32) {
    %c0_i32 = arith.constant 0 : i32
    %c0_i32_0 = arith.constant 0 : i32
    %c0_i32_1 = arith.constant 0 : i32
    return %c0_i32, %c0_i32_0 : i32, i32
  }
  func.func @transform_3(%arg0: i32) -> (i32, i32) {
    %c0_i32 = arith.constant 0 : i32
    %c0_i32_0 = arith.constant 0 : i32
    %c0_i32_1 = arith.constant 0 : i32
    return %c0_i32, %c0_i32_0 : i32, i32
  }
  func.func @transform_4(%arg0: i32) -> (i32, i32) {
    %c0_i32 = arith.constant 0 : i32
    %c0_i32_0 = arith.constant 0 : i32
    return %arg0, %c0_i32 : i32, i32
  }
}

</mosaic_0001>

<llo_original>
// kernel: tpu_custom_call.1
$region0: #{tpu_custom_call.1}
  #allocation0 [shape = 'u32[]', space=smem, size = 0x4, offset = 0x4, fixed_abs, tag = 'smem constant byte address 0x4 - core index']
  #allocation1 [shape = 'u32[144,128]{1,0:T(1,128)}', space=vmem, size = 0x12000, scoped, tag = 'internal scratch']
  %s0 = inlined_call_operand.vmem [shape: f32[16,1], index: 0, kind: input, shape index: {}]
  %s1 = inlined_call_operand.vmem [shape: f32[1,128], index: 1, kind: input, shape index: {}]
  %s2 = inlined_call_operand.vmem [shape: f32[1,128], index: 2, kind: input, shape index: {}]
  %s3 = inlined_call_operand.hbm [shape: f32[128,128], index: 3, kind: input, shape index: {}]
  %s4 = inlined_call_operand.hbm [shape: f32[16,128], index: 4, kind: output, shape index: {}]
  %s5 = sld [smem:[#allocation0]]
  $region30: #{tpu_custom_call.1} parent=0
    _
  %s7 = ssub.s32 1, %s5
  %s8 = scalar_select 0, %s7, %s5
  $region1: #{tpu_custom_call.1} parent=0
    #allocation2 [shape = 'u8[65536]{0}', space=vmem, size = 0x10000, scoped, tag = 'input window, operand 3, single buffered']
    #allocation3 [shape = 's32[1]{0}', space=sflag, size = 0x4, scoped, tag = 'scoped memory for tpu_custom_call.1']
    #allocation4 [shape = 's32[1]{0}', space=sflag, size = 0x4, scoped, tag = 'scoped memory for tpu_custom_call.1']
    #allocation5 [shape = 'u8[8192]{0}', space=vmem, size = 0x2000, scoped, tag = 'output window, operand 0, single buffered']
    %9 = vsyncpa [#allocation3], 0
    %10 = vsyncpa [#allocation4], 0
    // Predicated region
    $region2: #{tpu_custom_call.1} parent=1 // pred_check
      _
    $region3: #{tpu_custom_call.1} parent=1 // pred_check_branch
      %12 = sbr.rel (0) target = $region5
    $region4: #{tpu_custom_call.1} parent=1 // pred_region
      _
    $region5: #{tpu_custom_call.1} parent=1 // pred_fallthru
      _
    // Predicated region
    $region6: #{tpu_custom_call.1} parent=1 // pred_check
      _
    $region7: #{tpu_custom_call.1} parent=1 // pred_check_branch
      %14 = sbr.rel (0) target = $region9
    $region8: #{tpu_custom_call.1} parent=1 // pred_region
      _
    $region9: #{tpu_custom_call.1} parent=1 // pred_fallthru
      _
    // Predicated region
    $region10: #{tpu_custom_call.1} parent=1 // pred_check
      _
    $region11: #{tpu_custom_call.1} parent=1 // pred_check_branch
      %16 = sbr.rel (0) target = $region13
    $region12: #{tpu_custom_call.1} parent=1 // pred_region
      _
    $region13: #{tpu_custom_call.1} parent=1 // pred_fallthru
      _
    // Predicated region
    $region14: #{tpu_custom_call.1} parent=1 // pred_check
      _
    $region15: #{tpu_custom_call.1} parent=1 // pred_check_branch
      %18 = sbr.rel (0) target = $region17
    $region16: #{tpu_custom_call.1} parent=1 // pred_region
      %s20 = ssub.s32 2048, 2048
      %21 = vsyncadd [#allocation3], %s20
      %s22 = sshll.u32 [#allocation2], 4
      %s23 = int_to_ptr.vmem [resolvable:$true] %s22
      %28 = dma.hbm_to_vmem [thread:$0]  %s3, 2048, %s23, [#allocation3], 128, 128, 8
    $region17: #{tpu_custom_call.1} parent=1 // pred_fallthru
      _
    // Predicated region
    $region18: #{tpu_custom_call.1} parent=1 // pred_check
      _
    $region19: #{tpu_custom_call.1} parent=1 // pred_check_branch
      %30 = sbr.rel (0) target = $region21
    $region20: #{tpu_custom_call.1} parent=1 // pred_region
      %31 = dma.done [#allocation3], 2048
    $region21: #{tpu_custom_call.1} parent=1 // pred_fallthru
      _
    %v32 = vld [vmem:[%s0] sm:$0xff]
    %v33 = vld [vmem:[%s0 + $0x8] sm:$0xff]
    %v34 = vld [vmem:[%s1] sm:$0x1]
    %v35 = vld [vmem:[%s2] sm:$0x1]
    %37 = vset.pattern.permute.xlu0 0
    %38 = vperm.xlu0 %37, %v32
    %v39 = vpop.permute.xlu0 %38
    %42 = vset.pattern.permute.xlu0 0
    %43 = vperm.xlu0 %42, %v33
    %v44 = vpop.permute.xlu0 %43
    %v47 = vlaneseq
    %v48 = vshrl.u32 %v47, 7
    %v49 = vsub.s32 0, %v48
    %v50 = vrot.slane %v34, %v49
    %v52 = vmul.f32 %v39, %v50
    %v53 = vmul.f32 %v44, %v50
    %v55 = vlaneseq
    %v56 = vshrl.u32 %v55, 7
    %v57 = vsub.s32 0, %v56
    %v58 = vrot.slane %v35, %v57
    %v60 = vadd.f32 %v52, %v58
    %v61 = vadd.f32 %v53, %v58
    %62 = vmax.xlane.f32.xlu0 %v60
    %v63 = vpop.xlane.xlu0 %62
    %64 = vmax.xlane.f32.xlu0 %v61
    %v65 = vpop.xlane.xlu0 %64
    %v66 = vsub.f32 %v60, %v63
    %v67 = vsub.f32 %v61, %v65
    %v68 = vmul.f32 %v66, 1.442695
    %v69 = vpow.pop %v68
    %v70 = vmul.f32 %v67, 1.442695
    %v71 = vpow.pop %v70
    %72 = vadd.xlane.f32.xlu0 %v69
    %v73 = vpop.xlane.xlu0 %72
    %74 = vadd.xlane.f32.xlu0 %v71
    %v75 = vpop.xlane.xlu0 %74
    %v76 = vld [vmem:[#allocation2] sm:$0xff]
    %v77 = vld [vmem:[#allocation2 + $0x8] sm:$0xff]
    %v78 = vld [vmem:[#allocation2 + $0x10] sm:$0xff]
    %v79 = vld [vmem:[#allocation2 + $0x18] sm:$0xff]
    %v80 = vld [vmem:[#allocation2 + $0x20] sm:$0xff]
    %v81 = vld [vmem:[#allocation2 + $0x28] sm:$0xff]
    %v82 = vld [vmem:[#allocation2 + $0x30] sm:$0xff]
    %v83 = vld [vmem:[#allocation2 + $0x38] sm:$0xff]
    %v84 = vld [vmem:[#allocation2 + $0x40] sm:$0xff]
    %v85 = vld [vmem:[#allocation2 + $0x48] sm:$0xff]
    %v86 = vld [vmem:[#allocation2 + $0x50] sm:$0xff]
    %v87 = vld [vmem:[#allocation2 + $0x58] sm:$0xff]
    %v88 = vld [vmem:[#allocation2 + $0x60] sm:$0xff]
    %v89 = vld [vmem:[#allocation2 + $0x68] sm:$0xff]
    %v90 = vld [vmem:[#allocation2 + $0x70] sm:$0xff]
    %v91 = vld [vmem:[#allocation2 + $0x78] sm:$0xff]
    %92 = vmatprep.subr.mxu0 0.0
    %93 = vmatpush1.msra.mxu0 %v76
    %94 = vmatprep.subr.mxu0 0.0
    %95 = vmatpush1.msra.mxu0 %v77
    %96 = vmatprep.subr.mxu0 0.0
    %97 = vmatpush1.msra.mxu0 %v78
    %98 = vmatprep.subr.mxu0 0.0
    %99 = vmatpush1.msra.mxu0 %v79
    %100 = vmatprep.subr.mxu0 0.0
    %101 = vmatpush1.msra.mxu0 %v80
    %102 = vmatprep.subr.mxu0 0.0
    %103 = vmatpush1.msra.mxu0 %v81
    %104 = vmatprep.subr.mxu0 0.0
    %105 = vmatpush1.msra.mxu0 %v82
    %106 = vmatprep.subr.mxu0 0.0
    %107 = vmatpush1.msra.mxu0 %v83
    %108 = vmatprep.subr.mxu0 0.0
    %109 = vmatpush1.msra.mxu0 %v84
    %110 = vmatprep.subr.mxu0 0.0
    %111 = vmatpush1.msra.mxu0 %v85
    %112 = vmatprep.subr.mxu0 0.0
    %113 = vmatpush1.msra.mxu0 %v86
    %114 = vmatprep.subr.mxu0 0.0
    %115 = vmatpush1.msra.mxu0 %v87
    %116 = vmatprep.subr.mxu0 0.0
    %117 = vmatpush1.msra.mxu0 %v88
    %118 = vmatprep.subr.mxu0 0.0
    %119 = vmatpush1.msra.mxu0 %v89
    %120 = vmatprep.subr.mxu0 0.0
    %121 = vmatpush1.msra.mxu0 %v90
    %122 = vmatprep.subr.mxu0 0.0
    %123 = vmatpush1.msra.mxu0 %v91
    %124 = vmatprep.subr.mxu0 0.0
    %125 = vmatpush1.msra.mxu0 0.0
    %126 = vmatprep.subr.mxu0 0.0
    %127 = vmatpush1.msra.mxu0 0.0
    %128 = vmatprep.subr.mxu0 0.0
    %129 = vmatpush1.msra.mxu0 0.0
    %130 = vmatprep.subr.mxu0 0.0
    %131 = vmatpush1.msra.mxu0 0.0
    %132 = vmatprep.subr.mxu0 0.0
    %133 = vmatpush1.msra.mxu0 0.0
    %134 = vmatprep.subr.mxu0 0.0
    %135 = vmatpush1.msra.mxu0 0.0
    %136 = vmatprep.subr.mxu0 0.0
    %137 = vmatpush1.msra.mxu0 0.0
    %138 = vmatprep.subr.mxu0 0.0
    %139 = vmatpush1.msra.mxu0 0.0
    %140 = vmatprep.subr.mxu0 0.0
    %141 = vmatpush1.msra.mxu0 0.0
    %142 = vmatprep.subr.mxu0 0.0
    %143 = vmatpush1.msra.mxu0 0.0
    %144 = vmatprep.subr.mxu0 0.0
    %145 = vmatpush1.msra.mxu0 0.0
    %146 = vmatprep.subr.mxu0 0.0
    %147 = vmatpush1.msra.mxu0 0.0
    %148 = vmatprep.subr.mxu0 0.0
    %149 = vmatpush1.msra.mxu0 0.0
    %150 = vmatprep.subr.mxu0 0.0
    %151 = vmatpush1.msra.mxu0 0.0
    %152 = vmatprep.subr.mxu0 0.0
    %153 = vmatpush1.msra.mxu0 0.0
    %154 = vmatprep.subr.mxu0 0.0
    %155 = vmatpush1.msra.mxu0 0.0
    %156 = vmatprep.mubr.f32.mxu0 0.0
    %157 = vmatmul.mubr.f32.gmra.mrb[0].mxu0 %v69
    %v158 = vpop.f32.mrb[0].mxu0
    %v159 = vadd.f32 0.0, %v158
    %v160 = vpop.f32.mrb[0].mxu0
    %161 = vmatprep.mubr.f32.mxu0 0.0
    %162 = vmatmul.mubr.f32.gmra.mrb[0].mxu0 %v71
    %v163 = vpop.f32.mrb[0].mxu0
    %v164 = vadd.f32 0.0, %v163
    %v165 = vpop.f32.mrb[0].mxu0
    %166 = vdwg.mxu0
    %v167 = vrcp.pop %v73
    %v168 = vrcp.pop %v75
    %v169 = vmul.f32 %v159, %v167
    %v170 = vmul.f32 %v164, %v168
    %171 = vst [vmem:[#allocation5] sm:$0xff] %v169
    %172 = vst [vmem:[#allocation5 + $0x8] sm:$0xff] %v170
    // Predicated region
    $region22: #{tpu_custom_call.1} parent=1 // pred_check
      _
    $region23: #{tpu_custom_call.1} parent=1 // pred_check_branch
      %174 = sbr.rel (0) target = $region25
    $region24: #{tpu_custom_call.1} parent=1 // pred_region
      %s176 = ssub.s32 256, 256
      %177 = vsyncadd [#allocation4], %s176
      %s178 = sshll.u32 [#allocation5], 4
      %s179 = int_to_ptr.vmem [resolvable:$true] %s178
      %184 = dma.vmem_to_hbm [thread:$0]  %s179, 256, %s4, [#allocation4], 128, 128, 8
    $region25: #{tpu_custom_call.1} parent=1 // pred_fallthru
      _
    // Predicated region
    $region26: #{tpu_custom_call.1} parent=1 // pred_check
      _
    $region27: #{tpu_custom_call.1} parent=1 // pred_check_branch
      %186 = sbr.rel (0) target = $region29
    $region28: #{tpu_custom_call.1} parent=1 // pred_region
      %187 = dma.done [#allocation4], 256
    $region29: #{tpu_custom_call.1} parent=1 // pred_fallthru
      _
    %188 = vsyncpa [#allocation3], 1
    %189 = vsyncpa [#allocation4], 1

</llo_original>
